<compile_context>
chip_gen: v6e
topology: v6e:2x2x1
jax: 0.10.0
libtpu: 0.0.40
codegen_flags: <defaults>
</compile_context>

<pallas_src>
import jax
import jax.numpy as jnp
from jax.experimental import pallas as pl
from jax.experimental.pallas import tpu as pltpu

KH, KW = 3, 3


def conv3x3_kernel(w_ref, b_ref, x_ref, o_ref):
    # x_ref / o_ref: (BN*H_pad, W_pad) f32 VMEM blocks (batch folded into rows).
    # w_ref: (9,) f32 SMEM, b_ref: (1,) f32 SMEM.
    x = x_ref[...]
    rows = x.shape[0]          # multiple of 8  (sublane-aligned)
    wp = x.shape[1]            # multiple of 128 (lane-aligned)

    # Lane-shifted copies: x1[r, c] == x[r, c+1], x2[r, c] == x[r, c+2] (circular;
    # the wrapped columns only affect padded output columns, sliced off outside).
    x1 = pltpu.roll(x, shift=wp - 1, axis=1)
    x2 = pltpu.roll(x, shift=wp - 2, axis=1)

    # Per-row-offset partial sums (VPU), bias folded into the first one.
    r0 = w_ref[0] * x + w_ref[1] * x1 + w_ref[2] * x2 + b_ref[0]
    r1 = w_ref[3] * x + w_ref[4] * x1 + w_ref[5] * x2
    r2 = w_ref[6] * x + w_ref[7] * x1 + w_ref[8] * x2

    # Sublane rolls shift the partial sums up by 1 / 2 rows; the wrap only touches
    # padded rows (>= H-2 within each image), which the wrapper discards.
    o_ref[...] = (r0
                  + pltpu.roll(r1, shift=rows - 1, axis=0)
                  + pltpu.roll(r2, shift=rows - 2, axis=0))


@jax.jit
def conv2d_1x1x3x3(x_nchw, weight, bias):
    """x_nchw: (N, 1, H, W) float32; weight: (1, 1, 3, 3); bias: (1,)."""
    n, c, h, w = x_nchw.shape
    assert c == 1, "module is Conv2d(1, 1, 3)"
    oh, ow = h - KH + 1, w - KW + 1

    # Pad spatial dims so the lane axis is a multiple of 128 and the sublane axis a
    # multiple of 8 -> fully aligned, unmasked loads/stores inside the kernel.
    h_pad = ((h + 7) // 8) * 8
    w_pad = ((w + 127) // 128) * 128

    x = x_nchw.reshape(n, h, w).astype(jnp.float32)
    x = jnp.pad(x, ((0, 0), (0, h_pad - h), (0, w_pad - w)))

    # Batch many images per grid step (~1 MiB blocks: amortizes per-step overhead,
    # keeps double-buffered blocks + live temporaries well under scoped VMEM on
    # v5e/v6e (32/128 MiB) and v7x (64 MiB)).
    bytes_per_img = h_pad * w_pad * 4
    bn = max(1, min(n, (1 << 20) // bytes_per_img))
    n_pad = pl.cdiv(n, bn) * bn
    if n_pad != n:
        x = jnp.pad(x, ((0, n_pad - n), (0, 0), (0, 0)))

    # Fold batch into the sublane axis -> rank-2, lane-dense tiles.
    x2d = x.reshape(n_pad * h_pad, w_pad)

    w_flat = weight.reshape(KH * KW).astype(jnp.float32)
    b1 = bias.reshape(1).astype(jnp.float32)

    block_rows = bn * h_pad
    out2d = pl.pallas_call(
        conv3x3_kernel,
        out_shape=jax.ShapeDtypeStruct((n_pad * h_pad, w_pad), jnp.float32),
        grid_spec=pltpu.PrefetchScalarGridSpec(
            num_scalar_prefetch=0,
            grid=(n_pad // bn,),
            in_specs=[
                pl.BlockSpec(memory_space=pltpu.MemorySpace.SMEM),   # weight (9,)
                pl.BlockSpec(memory_space=pltpu.MemorySpace.SMEM),   # bias (1,)
                pl.BlockSpec((block_rows, w_pad), lambda i: (i, 0)),  # x tile
            ],
            out_specs=pl.BlockSpec((block_rows, w_pad), lambda i: (i, 0)),
        ),
        compiler_params=pltpu.CompilerParams(
            # batch axis is embarrassingly parallel (shards across v7x's 2 TCs;
            # harmless on single-TC v5e/v6e).
            dimension_semantics=("parallel",)),
    )(w_flat, b1, x2d)

    out = out2d.reshape(n_pad, h_pad, w_pad)[:n, :oh, :ow]
    return out.reshape(n, 1, oh, ow)


def conv2d_reference(x_nchw, weight, bias):
    """Plain-JAX reference of the same valid 3x3 conv (sanity check)."""
    n, _, h, w = x_nchw.shape
    oh, ow = h - KH + 1, w - KW + 1
    x = x_nchw.reshape(n, h, w)
    w2d = weight.reshape(KH, KW)
    acc = jnp.full((n, oh, ow), bias[0], dtype=jnp.float32)
    for di in range(KH):
        for dj in range(KW):
            acc = acc + w2d[di, dj] * x[:, di:di + oh, dj:dj + ow]
    return acc.reshape(n, 1, oh, ow)


if __name__ == "__main__":
    key = jax.random.PRNGKey(0)
    kx, kw, kb = jax.random.split(key, 3)

    # Deterministic parameter init mirroring PyTorch Conv2d default
    # (uniform in [-1/sqrt(fan_in), 1/sqrt(fan_in)], fan_in = 1*3*3 = 9).
    bound = 1.0 / jnp.sqrt(9.0)
    weight = jax.random.uniform(kw, (1, 1, KH, KW), jnp.float32, -bound, bound)
    bias = jax.random.uniform(kb, (1,), jnp.float32, -bound, bound)

    # Small NCHW input consistent with Conv2d(1, 1, 3).
    x = jax.random.normal(kx, (2, 1, 16, 16), jnp.float32)

    y = conv2d_1x1x3x3(x, weight, bias)
    jax.block_until_ready(y)

    y_ref = conv2d_reference(x, weight, bias)
    assert y.shape == (2, 1, 14, 14)
    assert jnp.allclose(y, y_ref, atol=1e-5, rtol=1e-5)

    print("KERNEL_OK")
</pallas_src>

<mosaic_0001>
module attributes {stable_mosaic.version = 11 : i64} {
  func.func @conv3x3_kernel(%arg0: i32, %arg1: memref<9xf32, #tpu.memory_space<smem>>, %arg2: memref<1xf32, #tpu.memory_space<smem>>, %arg3: memref<32x128xf32, #tpu.memory_space<vmem>>, %arg4: memref<32x128xf32, #tpu.memory_space<vmem>>) attributes {dimension_semantics = [#tpu.dimension_semantics<parallel>], iteration_bounds = array<i64: 1>, scalar_prefetch = 0 : i64, scratch_operands = 0 : i64, tpu.core_type = #tpu.core_type<tc>, window_params = [{transform_indices = @transform_0, window_bounds = array<i64: 9>}, {transform_indices = @transform_1, window_bounds = array<i64: 1>}, {transform_indices = @transform_2, window_bounds = array<i64: 32, 128>}, {transform_indices = @transform_3, window_bounds = array<i64: 32, 128>}]} {
    %c0 = arith.constant 0 : index
    %c0_0 = arith.constant 0 : index
    %0 = vector.load %arg3[%c0, %c0_0] : memref<32x128xf32, #tpu.memory_space<vmem>>, vector<32x128xf32>
    %c127_i32 = arith.constant 127 : i32
    %1 = tpu.dynamic_rotate %0 by %c127_i32 dim 1 : vector<32x128xf32>, i32 -> vector<32x128xf32>
    %c126_i32 = arith.constant 126 : i32
    %2 = tpu.dynamic_rotate %0 by %c126_i32 dim 1 : vector<32x128xf32>, i32 -> vector<32x128xf32>
    %c0_1 = arith.constant 0 : index
    %3 = memref.load %arg1[%c0_1] : memref<9xf32, #tpu.memory_space<smem>>
    %4 = vector.broadcast %3 : f32 to vector<32x128xf32>
    %5 = arith.mulf %4, %0 : vector<32x128xf32>
    %c1 = arith.constant 1 : index
    %6 = memref.load %arg1[%c1] : memref<9xf32, #tpu.memory_space<smem>>
    %7 = vector.broadcast %6 : f32 to vector<32x128xf32>
    %8 = arith.mulf %7, %1 : vector<32x128xf32>
    %9 = arith.addf %5, %8 : vector<32x128xf32>
    %c2 = arith.constant 2 : index
    %10 = memref.load %arg1[%c2] : memref<9xf32, #tpu.memory_space<smem>>
    %11 = vector.broadcast %10 : f32 to vector<32x128xf32>
    %12 = arith.mulf %11, %2 : vector<32x128xf32>
    %13 = arith.addf %9, %12 : vector<32x128xf32>
    %c0_2 = arith.constant 0 : index
    %14 = memref.load %arg2[%c0_2] : memref<1xf32, #tpu.memory_space<smem>>
    %15 = vector.broadcast %14 : f32 to vector<32x128xf32>
    %16 = arith.addf %13, %15 : vector<32x128xf32>
    %c3 = arith.constant 3 : index
    %17 = memref.load %arg1[%c3] : memref<9xf32, #tpu.memory_space<smem>>
    %18 = vector.broadcast %17 : f32 to vector<32x128xf32>
    %19 = arith.mulf %18, %0 : vector<32x128xf32>
    %c4 = arith.constant 4 : index
    %20 = memref.load %arg1[%c4] : memref<9xf32, #tpu.memory_space<smem>>
    %21 = vector.broadcast %20 : f32 to vector<32x128xf32>
    %22 = arith.mulf %21, %1 : vector<32x128xf32>
    %23 = arith.addf %19, %22 : vector<32x128xf32>
    %c5 = arith.constant 5 : index
    %24 = memref.load %arg1[%c5] : memref<9xf32, #tpu.memory_space<smem>>
    %25 = vector.broadcast %24 : f32 to vector<32x128xf32>
    %26 = arith.mulf %25, %2 : vector<32x128xf32>
    %27 = arith.addf %23, %26 : vector<32x128xf32>
    %c6 = arith.constant 6 : index
    %28 = memref.load %arg1[%c6] : memref<9xf32, #tpu.memory_space<smem>>
    %29 = vector.broadcast %28 : f32 to vector<32x128xf32>
    %30 = arith.mulf %29, %0 : vector<32x128xf32>
    %c7 = arith.constant 7 : index
    %31 = memref.load %arg1[%c7] : memref<9xf32, #tpu.memory_space<smem>>
    %32 = vector.broadcast %31 : f32 to vector<32x128xf32>
    %33 = arith.mulf %32, %1 : vector<32x128xf32>
    %34 = arith.addf %30, %33 : vector<32x128xf32>
    %c8 = arith.constant 8 : index
    %35 = memref.load %arg1[%c8] : memref<9xf32, #tpu.memory_space<smem>>
    %36 = vector.broadcast %35 : f32 to vector<32x128xf32>
    %37 = arith.mulf %36, %2 : vector<32x128xf32>
    %38 = arith.addf %34, %37 : vector<32x128xf32>
    %c31_i32 = arith.constant 31 : i32
    %39 = tpu.dynamic_rotate %27 by %c31_i32 dim 0 : vector<32x128xf32>, i32 -> vector<32x128xf32>
    %40 = arith.addf %16, %39 : vector<32x128xf32>
    %c30_i32 = arith.constant 30 : i32
    %41 = tpu.dynamic_rotate %38 by %c30_i32 dim 0 : vector<32x128xf32>, i32 -> vector<32x128xf32>
    %42 = arith.addf %40, %41 : vector<32x128xf32>
    %c0_3 = arith.constant 0 : index
    %c0_4 = arith.constant 0 : index
    %43 = vector.load %arg4[%c0_3, %c0_4] : memref<32x128xf32, #tpu.memory_space<vmem>>, vector<32x128xf32>
    tpu.vector_store %arg4[%c0_3, %c0_4], %42 {strides = array<i32>} : memref<32x128xf32, #tpu.memory_space<vmem>>, vector<32x128xf32>,
    return
  }
  func.func @transform_0(%arg0: i32) -> i32 {
    %c0_i32 = arith.constant 0 : i32
    %c0_i32_0 = arith.constant 0 : i32
    return %c0_i32 : i32
  }
  func.func @transform_1(%arg0: i32) -> i32 {
    %c0_i32 = arith.constant 0 : i32
    %c0_i32_0 = arith.constant 0 : i32
    return %c0_i32 : i32
  }
  func.func @transform_2(%arg0: i32) -> (i32, i32) {
    %c0_i32 = arith.constant 0 : i32
    %c0_i32_0 = arith.constant 0 : i32
    return %arg0, %c0_i32 : i32, i32
  }
  func.func @transform_3(%arg0: i32) -> (i32, i32) {
    %c0_i32 = arith.constant 0 : i32
    %c0_i32_0 = arith.constant 0 : i32
    return %arg0, %c0_i32 : i32, i32
  }
}

</mosaic_0001>

<llo_original>
// kernel: conv2d_1x1x3x3.1
$region0: #{conv2d_1x1x3x3.1}
  #allocation0 [shape = 'u32[]', space=smem, size = 0x4, offset = 0x4, fixed_abs, tag = 'smem constant byte address 0x4 - core index']
  #allocation1 [shape = 'u32[144,128]{1,0:T(1,128)}', space=vmem, size = 0x12000, scoped, tag = 'internal scratch']
  #allocation2 [shape = 'f32[1]{0:T(128)S(6)}', space=smem, size = 0x200, scoped, tag = 'scoped memory for conv2d_1x1x3x3.1']
  %s0 = inlined_call_operand.vmem [shape: f32[9], index: 0, kind: input, shape index: {}]
  %s1 = inlined_call_operand.<no memory space> [shape: f32[1], index: 1, kind: input, shape index: {}]
  %s2 = inlined_call_operand.vmem [shape: f32[32,128], index: 2, kind: input, shape index: {}]
  %s3 = inlined_call_operand.vmem [shape: f32[32,128], index: 3, kind: output, shape index: {}]
  %s4 = sld [smem:[#allocation0]]
  $region26: #{conv2d_1x1x3x3.1} parent=0
    _
  %s6 = ssub.s32 1, %s4
  %s7 = scalar_select 0, %s6, %s4
  %8 = sst [smem:[#allocation2]] %s1
  $region1: #{conv2d_1x1x3x3.1} parent=0
    #allocation3 [shape = 'u8[512]{0}', space=smem, size = 0x200, scoped, tag = 'input window, operand 0, single buffered']
    #allocation4 [shape = 's32[1]{0}', space=sflag, size = 0x4, scoped, tag = 'scoped memory for conv2d_1x1x3x3.1']
    %9 = vsyncpa [#allocation4], 0
    // Predicated region
    $region2: #{conv2d_1x1x3x3.1} parent=1 // pred_check
      _
    $region3: #{conv2d_1x1x3x3.1} parent=1 // pred_check_branch
      %11 = sbr.rel (0) target = $region5
    $region4: #{conv2d_1x1x3x3.1} parent=1 // pred_region
      %s13 = ssub.s32 16, 16
      %14 = vsyncadd [#allocation4], %s13
      %s16 = sshll.u32 %s0, 4
      %s17 = int_to_ptr.vmem [resolvable:$true] %s16
      %19 = dma.vmem_to_smem %s17, 16, [#allocation3], [#allocation4]
    $region5: #{conv2d_1x1x3x3.1} parent=1 // pred_fallthru
      _
    // Predicated region
    $region6: #{conv2d_1x1x3x3.1} parent=1 // pred_check
      _
    $region7: #{conv2d_1x1x3x3.1} parent=1 // pred_check_branch
      %21 = sbr.rel (0) target = $region9
    $region8: #{conv2d_1x1x3x3.1} parent=1 // pred_region
      _
    $region9: #{conv2d_1x1x3x3.1} parent=1 // pred_fallthru
      _
    // Predicated region
    $region10: #{conv2d_1x1x3x3.1} parent=1 // pred_check
      _
    $region11: #{conv2d_1x1x3x3.1} parent=1 // pred_check_branch
      %23 = sbr.rel (0) target = $region13
    $region12: #{conv2d_1x1x3x3.1} parent=1 // pred_region
      _
    $region13: #{conv2d_1x1x3x3.1} parent=1 // pred_fallthru
      _
    // Predicated region
    $region14: #{conv2d_1x1x3x3.1} parent=1 // pred_check
      _
    $region15: #{conv2d_1x1x3x3.1} parent=1 // pred_check_branch
      %25 = sbr.rel (0) target = $region17
    $region16: #{conv2d_1x1x3x3.1} parent=1 // pred_region
      %26 = dma.done [#allocation4], 16
    $region17: #{conv2d_1x1x3x3.1} parent=1 // pred_fallthru
      _
    %27 = sfence
    %v28 = vld [vmem:[%s2] sm:$0xff]
    %v29 = vld [vmem:[%s2 + $0x8] sm:$0xff]
    %v30 = vld [vmem:[%s2 + $0x10] sm:$0xff]
    %v31 = vld [vmem:[%s2 + $0x18] sm:$0xff]
    %32 = vrot.lane.b32.xlu0 %v28, 127
    %v33 = vpop.permute.xlu0 %32
    %34 = vrot.lane.b32.xlu0 %v29, 127
    %v35 = vpop.permute.xlu0 %34
    %36 = vrot.lane.b32.xlu0 %v30, 127
    %v37 = vpop.permute.xlu0 %36
    %38 = vrot.lane.b32.xlu0 %v31, 127
    %v39 = vpop.permute.xlu0 %38
    %40 = vrot.lane.b32.xlu0 %v28, 126
    %v41 = vpop.permute.xlu0 %40
    %42 = vrot.lane.b32.xlu0 %v29, 126
    %v43 = vpop.permute.xlu0 %42
    %44 = vrot.lane.b32.xlu0 %v30, 126
    %v45 = vpop.permute.xlu0 %44
    %46 = vrot.lane.b32.xlu0 %v31, 126
    %v47 = vpop.permute.xlu0 %46
    %s48 = sld [smem:[#allocation3]]
    %v49 = vstv %s48
    %v50 = vmul.f32 %v49, %v28
    %v51 = vmul.f32 %v49, %v29
    %v52 = vmul.f32 %v49, %v30
    %v53 = vmul.f32 %v49, %v31
    %s54 = sld [smem:[#allocation3 + $0x1]]
    %v55 = vstv %s54
    %v56 = vmul.f32 %v55, %v33
    %v57 = vmul.f32 %v55, %v35
    %v58 = vmul.f32 %v55, %v37
    %v59 = vmul.f32 %v55, %v39
    %v60 = vadd.f32 %v50, %v56
    %v61 = vadd.f32 %v51, %v57
    %v62 = vadd.f32 %v52, %v58
    %v63 = vadd.f32 %v53, %v59
    %s64 = sld [smem:[#allocation3 + $0x2]]
    %v65 = vstv %s64
    %v66 = vmul.f32 %v65, %v41
    %v67 = vmul.f32 %v65, %v43
    %v68 = vmul.f32 %v65, %v45
    %v69 = vmul.f32 %v65, %v47
    %v70 = vadd.f32 %v60, %v66
    %v71 = vadd.f32 %v61, %v67
    %v72 = vadd.f32 %v62, %v68
    %v73 = vadd.f32 %v63, %v69
    %s74 = sld [smem:[#allocation2]]
    %v75 = vstv %s74
    %v76 = vadd.f32 %v70, %v75
    %v77 = vadd.f32 %v71, %v75
    %v78 = vadd.f32 %v72, %v75
    %v79 = vadd.f32 %v73, %v75
    %s80 = sld [smem:[#allocation3 + $0x3]]
    %v81 = vstv %s80
    %v82 = vmul.f32 %v81, %v28
    %v83 = vmul.f32 %v81, %v29
    %v84 = vmul.f32 %v81, %v30
    %v85 = vmul.f32 %v81, %v31
    %s86 = sld [smem:[#allocation3 + $0x4]]
    %v87 = vstv %s86
    %v88 = vmul.f32 %v87, %v33
    %v89 = vmul.f32 %v87, %v35
    %v90 = vmul.f32 %v87, %v37
    %v91 = vmul.f32 %v87, %v39
    %v92 = vadd.f32 %v82, %v88
    %v93 = vadd.f32 %v83, %v89
    %v94 = vadd.f32 %v84, %v90
    %v95 = vadd.f32 %v85, %v91
    %s96 = sld [smem:[#allocation3 + $0x5]]
    %v97 = vstv %s96
    %v98 = vmul.f32 %v97, %v41
    %v99 = vmul.f32 %v97, %v43
    %v100 = vmul.f32 %v97, %v45
    %v101 = vmul.f32 %v97, %v47
    %v102 = vadd.f32 %v92, %v98
    %v103 = vadd.f32 %v93, %v99
    %v104 = vadd.f32 %v94, %v100
    %v105 = vadd.f32 %v95, %v101
    %s106 = sld [smem:[#allocation3 + $0x6]]
    %v107 = vstv %s106
    %v108 = vmul.f32 %v107, %v28
    %v109 = vmul.f32 %v107, %v29
    %v110 = vmul.f32 %v107, %v30
    %v111 = vmul.f32 %v107, %v31
    %s112 = sld [smem:[#allocation3 + $0x7]]
    %v113 = vstv %s112
    %v114 = vmul.f32 %v113, %v33
    %v115 = vmul.f32 %v113, %v35
    %v116 = vmul.f32 %v113, %v37
    %v117 = vmul.f32 %v113, %v39
    %v118 = vadd.f32 %v108, %v114
    %v119 = vadd.f32 %v109, %v115
    %v120 = vadd.f32 %v110, %v116
    %v121 = vadd.f32 %v111, %v117
    %s122 = sld [smem:[#allocation3 + $0x8]]
    %v123 = vstv %s122
    %v124 = vmul.f32 %v123, %v41
    %v125 = vmul.f32 %v123, %v43
    %v126 = vmul.f32 %v123, %v45
    %v127 = vmul.f32 %v123, %v47
    %v128 = vadd.f32 %v118, %v124
    %v129 = vadd.f32 %v119, %v125
    %v130 = vadd.f32 %v120, %v126
    %v131 = vadd.f32 %v121, %v127
    %v132 = vrot.slane %v102, 1
    %v133 = vrot.slane %v103, 1
    %v134 = vrot.slane %v104, 1
    %v135 = vrot.slane %v105, 1
    %v136 = vlaneseq
    %v137 = vshrl.u32 %v136, 7
    %vm138 = vcmp.lt.s32.totalorder %v137, 7
    %v139 = vsel %vm138, %v134, %v135
    %v140 = vsel %vm138, %v133, %v134
    %v141 = vsel %vm138, %v132, %v133
    %v142 = vsel %vm138, %v135, %v132
    %v143 = vadd.f32 %v76, %v141
    %v144 = vadd.f32 %v77, %v140
    %v145 = vadd.f32 %v78, %v139
    %v146 = vadd.f32 %v79, %v142
    %v147 = vrot.slane %v128, 2
    %v148 = vrot.slane %v129, 2
    %v149 = vrot.slane %v130, 2
    %v150 = vrot.slane %v131, 2
    %vm151 = vcmp.lt.s32.totalorder %v137, 6
    %v152 = vsel %vm151, %v149, %v150
    %v153 = vsel %vm151, %v148, %v149
    %v154 = vsel %vm151, %v147, %v148
    %v155 = vsel %vm151, %v150, %v147
    %v156 = vadd.f32 %v143, %v154
    %v157 = vadd.f32 %v144, %v153
    %v158 = vadd.f32 %v145, %v152
    %v159 = vadd.f32 %v146, %v155
    %160 = vst [vmem:[%s3] sm:$0xff] %v156
    %161 = vst [vmem:[%s3 + $0x8] sm:$0xff] %v157
    %162 = vst [vmem:[%s3 + $0x10] sm:$0xff] %v158
    %163 = vst [vmem:[%s3 + $0x18] sm:$0xff] %v159
    // Predicated region
    $region18: #{conv2d_1x1x3x3.1} parent=1 // pred_check
      _
    $region19: #{conv2d_1x1x3x3.1} parent=1 // pred_check_branch
      %165 = sbr.rel (0) target = $region21
    $region20: #{conv2d_1x1x3x3.1} parent=1 // pred_region
      _
    $region21: #{conv2d_1x1x3x3.1} parent=1 // pred_fallthru
      _
    // Predicated region
    $region22: #{conv2d_1x1x3x3.1} parent=1 // pred_check
      _
    $region23: #{conv2d_1x1x3x3.1} parent=1 // pred_check_branch
      %167 = sbr.rel (0) target = $region25
    $region24: #{conv2d_1x1x3x3.1} parent=1 // pred_region
      _
    $region25: #{conv2d_1x1x3x3.1} parent=1 // pred_fallthru
      _
    %168 = vsyncpa [#allocation4], 1

</llo_original>
